<compile_context>
chip_gen: v7x
topology: tpu7x:2x2x1
jax: 0.10.0
libtpu: 0.0.40
codegen_flags: <defaults>
</compile_context>

<pallas_src>
import jax
import jax.numpy as jnp
from jax.experimental import pallas as pl
from jax.experimental.pallas import tpu as pltpu


def _fe_kernel(x_ref, w_ref, o_ref):
    # x_ref: (bn_tile, 3, p_tile)   channels-first pixel slab (lane-dense)
    # w_ref: (3, C, 1)              conv weight column per input channel (resident)
    # o_ref: (bn_tile, C, p_tile)   lane-dense output slab
    x0 = x_ref[:, 0:1, :]          # (bn_tile, 1, p_tile)
    x1 = x_ref[:, 1:2, :]
    x2 = x_ref[:, 2:3, :]
    w0 = w_ref[0][None]            # (1, C, 1) -- hoisted weight broadcasts
    w1 = w_ref[1][None]
    w2 = w_ref[2][None]
    # VPU broadcast-FMAs: (1,C,1) * (bn,1,P) -> (bn,C,P)
    y = w0 * x0 + w1 * x1 + w2 * x2
    # TODO(synk): if a v7x bundle dump shows VALU saturation, move this K=3
    # contraction to the idle MXU (einsum) and keep only the LeakyReLU on VPU.
    # LeakyReLU(0.1): single max instead of compare+select
    o_ref[...] = jnp.maximum(y, 0.1 * y).astype(o_ref.dtype)


def _budgets():
    """(target_tile_bytes, vmem_limit_bytes) tuned per TPU generation.

    v7x has only 64 MiB VMEM per TensorCore -> small tiles and a modest limit
    leave headroom for compiler-internal scratch; v5e/v6e (128 MiB physical)
    can take larger tiles (fewer, larger contiguous DMAs).
    """
    try:
        info = pltpu.get_tpu_info()
        vmem_cap = int(getattr(info, "vmem_capacity_bytes", 64 << 20))
    except Exception:
        vmem_cap = 64 << 20  # conservative: assume v7x-sized VMEM
    if vmem_cap >= (100 << 20):      # v5e / v6e
        return 16 << 20, 96 << 20
    return 5 << 20, 40 << 20          # v7x-safe


def _pick_tiles(BN, HW, C, target_bytes, min_steps=8):
    """Pick (bn_tile, p_tile) dividing (BN, HW).  HW must be a multiple of 128.

    Each grid step moves ~target_bytes (a few MiB: amortizes ~0.35us/step
    overhead, double-buffered working set stays far under the VMEM limit), and
    the grid is kept >= min_steps deep so input DMA / compute / output DMA
    overlap and the v7x megacore split is balanced.
    """
    # VMEM bytes per pixel per image: input (3 sublanes padded to 8) + C out, f32
    per_pix = (8 + C) * 4

    p_divs = [d for d in range(128, HW + 1, 128) if HW % d == 0] or [HW]
    bn_divs = [d for d in range(1, BN + 1) if BN % d == 0]

    # Pixel tile: largest lane-aligned divisor within the byte budget (always
    # capped -- never "full HW regardless of size").
    cap_p = max(128, target_bytes // per_pix)
    p_tile = max([d for d in p_divs if d <= cap_p], default=p_divs[0])

    # Batch tile: largest divisor of BN that keeps the step within budget.
    cap_bn = max(1, target_bytes // (p_tile * per_pix))
    bn_tile = max([d for d in bn_divs if d <= cap_bn], default=1)

    def n_steps(bt, pt):
        return (BN // bt) * (HW // pt)

    # Deepen the pipeline: shrink bn_tile first (keeps each DMA a contiguous
    # full-HW run per image), then p_tile, until >= min_steps grid steps.
    while n_steps(bn_tile, p_tile) < min_steps:
        smaller_bn = [d for d in bn_divs if d < bn_tile]
        smaller_p = [d for d in p_divs if d < p_tile]
        if smaller_bn:
            bn_tile = max(smaller_bn)
        elif smaller_p:
            p_tile = max(smaller_p)
        else:
            break

    # Prefer an even total step count so v7x's two TensorCores get equal work.
    if n_steps(bn_tile, p_tile) % 2 == 1 and n_steps(bn_tile, p_tile) > 1:
        even_bn = [d for d in bn_divs if d <= bn_tile and (BN // d) % 2 == 0]
        even_p = [d for d in p_divs if d <= p_tile and (HW // d) % 2 == 0]
        if even_bn:
            bn_tile = max(even_bn)
        elif even_p:
            p_tile = max(even_p)

    return bn_tile, p_tile


def init_fea_extract(x, weight, *, target_tile_bytes=None, vmem_limit_bytes=None):
    """
    x      : (b, n, 3, h, w) float32  -- same axis convention as the PyTorch module
    weight : (C, 3) float32           -- conv weight with the trailing (1,1) squeezed
    returns: (b, n, C, h, w) float32
    """
    b, n, r, h, w = x.shape
    C, r2 = weight.shape
    assert r == r2 == 3
    BN, HW = b * n, h * w

    auto_tile, auto_limit = _budgets()
    if target_tile_bytes is None:
        target_tile_bytes = auto_tile
    if vmem_limit_bytes is None:
        vmem_limit_bytes = auto_limit

    # Free reshapes only -- stay in the native channels-first memory layout.
    x_cf = x.reshape(BN, r, HW)                     # (BN, 3, HW)

    # Keep the pixel (lane) axis a multiple of 128 so every load/store is
    # unmasked and lane-dense; pad only if necessary, slice back afterwards.
    HW_pad = ((HW + 127) // 128) * 128
    if HW_pad != HW:
        x_cf = jnp.pad(x_cf, ((0, 0), (0, 0), (0, HW_pad - HW)))

    w3 = jnp.transpose(weight)[:, :, None]          # (3, C, 1), tiny, VMEM-resident

    bn_tile, p_tile = _pick_tiles(BN, HW_pad, C, target_tile_bytes)
    grid = (BN // bn_tile, HW_pad // p_tile)

    cost = pl.CostEstimate(
        flops=7 * C * BN * HW,                      # 3 mul + 2 add + leaky (mul + max)
        transcendentals=0,
        bytes_accessed=4 * (3 + C) * BN * HW + 4 * 3 * C,
    )

    y = pl.pallas_call(
        _fe_kernel,
        out_shape=jax.ShapeDtypeStruct((BN, C, HW_pad), x.dtype),
        grid_spec=pltpu.PrefetchScalarGridSpec(
            num_scalar_prefetch=0,
            grid=grid,
            in_specs=[
                pl.BlockSpec((bn_tile, r, p_tile), lambda i, j: (i, 0, j)),
                pl.BlockSpec((r, C, 1), lambda i, j: (0, 0, 0)),   # resident weight
            ],
            out_specs=pl.BlockSpec((bn_tile, C, p_tile), lambda i, j: (i, 0, j)),
        ),
        compiler_params=pltpu.CompilerParams(
            dimension_semantics=("parallel", "parallel"),
            vmem_limit_bytes=vmem_limit_bytes,
        ),
        cost_estimate=cost,
    )(x_cf, w3)

    if HW_pad != HW:
        y = y[:, :, :HW]

    # Free reshape back to the PyTorch output layout (b, n, C, h, w).
    return y.reshape(b, n, C, h, w)


def _reference(x, weight):
    # pure-JAX reference of the PyTorch forward
    b, n, r, h, w = x.shape
    x2 = x.reshape(b * n, r, h, w)
    y = jnp.einsum("bchw,oc->bohw", x2, weight)
    y = jnp.where(y > 0, y, 0.1 * y)
    C = weight.shape[0]
    return y.reshape(b, n, C, h, w)


if __name__ == "__main__":
    key = jax.random.PRNGKey(0)
    kx, kw = jax.random.split(key)

    b, n, r, h, w = 2, 4, 3, 16, 16
    channel = 32

    x = jax.random.normal(kx, (b, n, r, h, w), dtype=jnp.float32)
    # deterministic "kaiming-ish" init for Conv2d(3, channel, 1, 1) weight, (C, 3)
    weight = jax.random.normal(kw, (channel, r), dtype=jnp.float32) * (1.0 / jnp.sqrt(3.0))

    out = jax.block_until_ready(init_fea_extract(x, weight))

    ref = _reference(x, weight)
    assert out.shape == (b, n, channel, h, w)
    assert jnp.allclose(out, ref, atol=1e-5, rtol=1e-5)

    print("KERNEL_OK")
</pallas_src>

<mosaic_0001>
module attributes {stable_mosaic.version = 11 : i64} {
  func.func @_fe_kernel(%arg0: i32, %arg1: i32, %arg2: memref<1x3x256xf32, #tpu.memory_space<vmem>>, %arg3: memref<3x32x1xf32, #tpu.memory_space<vmem>>, %arg4: memref<1x32x256xf32, #tpu.memory_space<vmem>>) attributes {dimension_semantics = [#tpu.dimension_semantics<parallel>, #tpu.dimension_semantics<parallel>], iteration_bounds = array<i64: 8, 1>, scalar_prefetch = 0 : i64, scratch_operands = 0 : i64, tpu.core_type = #tpu.core_type<tc>, window_params = [{transform_indices = @transform_0, window_bounds = array<i64: 1, 3, 256>}, {pipeline_mode = #tpu.pipeline_mode<synchronous>, transform_indices = @transform_1, window_bounds = array<i64: 3, 32, 1>}, {transform_indices = @transform_2, window_bounds = array<i64: 1, 32, 256>}]} {
    %c0 = arith.constant 0 : index
    %c0_0 = arith.constant 0 : index
    %c0_1 = arith.constant 0 : index
    %0 = vector.load %arg2[%c0, %c0_0, %c0_1] : memref<1x3x256xf32, #tpu.memory_space<vmem>>, vector<1x1x256xf32>
    %c0_2 = arith.constant 0 : index
    %c1 = arith.constant 1 : index
    %c0_3 = arith.constant 0 : index
    %1 = vector.load %arg2[%c0_2, %c1, %c0_3] : memref<1x3x256xf32, #tpu.memory_space<vmem>>, vector<1x1x256xf32>
    %c0_4 = arith.constant 0 : index
    %c2 = arith.constant 2 : index
    %c0_5 = arith.constant 0 : index
    %2 = vector.load %arg2[%c0_4, %c2, %c0_5] : memref<1x3x256xf32, #tpu.memory_space<vmem>>, vector<1x1x256xf32>
    %c0_6 = arith.constant 0 : index
    %c0_7 = arith.constant 0 : index
    %c0_8 = arith.constant 0 : index
    %3 = vector.load %arg3[%c0_6, %c0_7, %c0_8] : memref<3x32x1xf32, #tpu.memory_space<vmem>>, vector<1x32x1xf32>
    %4 = vector.shape_cast %3 : vector<1x32x1xf32> to vector<32x1xf32>
    %5 = vector.shape_cast %4 : vector<32x1xf32> to vector<1x32x1xf32>
    %c1_9 = arith.constant 1 : index
    %c0_10 = arith.constant 0 : index
    %c0_11 = arith.constant 0 : index
    %6 = vector.load %arg3[%c1_9, %c0_10, %c0_11] : memref<3x32x1xf32, #tpu.memory_space<vmem>>, vector<1x32x1xf32>
    %7 = vector.shape_cast %6 : vector<1x32x1xf32> to vector<32x1xf32>
    %8 = vector.shape_cast %7 : vector<32x1xf32> to vector<1x32x1xf32>
    %c2_12 = arith.constant 2 : index
    %c0_13 = arith.constant 0 : index
    %c0_14 = arith.constant 0 : index
    %9 = vector.load %arg3[%c2_12, %c0_13, %c0_14] : memref<3x32x1xf32, #tpu.memory_space<vmem>>, vector<1x32x1xf32>
    %10 = vector.shape_cast %9 : vector<1x32x1xf32> to vector<32x1xf32>
    %11 = vector.shape_cast %10 : vector<32x1xf32> to vector<1x32x1xf32>
    %12 = vector.broadcast %5 : vector<1x32x1xf32> to vector<1x32x256xf32>
    %13 = vector.broadcast %0 : vector<1x1x256xf32> to vector<1x32x256xf32>
    %14 = arith.mulf %12, %13 : vector<1x32x256xf32>
    %15 = vector.broadcast %8 : vector<1x32x1xf32> to vector<1x32x256xf32>
    %16 = vector.broadcast %1 : vector<1x1x256xf32> to vector<1x32x256xf32>
    %17 = arith.mulf %15, %16 : vector<1x32x256xf32>
    %18 = arith.addf %14, %17 : vector<1x32x256xf32>
    %19 = vector.broadcast %11 : vector<1x32x1xf32> to vector<1x32x256xf32>
    %20 = vector.broadcast %2 : vector<1x1x256xf32> to vector<1x32x256xf32>
    %21 = arith.mulf %19, %20 : vector<1x32x256xf32>
    %22 = arith.addf %18, %21 : vector<1x32x256xf32>
    %cst = arith.constant 1.000000e-01 : f32
    %23 = vector.broadcast %cst : f32 to vector<1x32x256xf32>
    %24 = arith.mulf %23, %22 : vector<1x32x256xf32>
    %25 = arith.maximumf %22, %24 : vector<1x32x256xf32>
    %c0_15 = arith.constant 0 : index
    %c0_16 = arith.constant 0 : index
    %c0_17 = arith.constant 0 : index
    %26 = vector.load %arg4[%c0_15, %c0_16, %c0_17] : memref<1x32x256xf32, #tpu.memory_space<vmem>>, vector<1x32x256xf32>
    tpu.vector_store %arg4[%c0_15, %c0_16, %c0_17], %25 {strides = array<i32>} : memref<1x32x256xf32, #tpu.memory_space<vmem>>, vector<1x32x256xf32>,
    return
  }
  func.func @transform_0(%arg0: i32, %arg1: i32) -> (i32, i32, i32) {
    %c0_i32 = arith.constant 0 : i32
    %c0_i32_0 = arith.constant 0 : i32
    return %arg0, %c0_i32, %arg1 : i32, i32, i32
  }
  func.func @transform_1(%arg0: i32, %arg1: i32) -> (i32, i32, i32) {
    %c0_i32 = arith.constant 0 : i32
    %c0_i32_0 = arith.constant 0 : i32
    %c0_i32_1 = arith.constant 0 : i32
    %c0_i32_2 = arith.constant 0 : i32
    return %c0_i32, %c0_i32_0, %c0_i32_1 : i32, i32, i32
  }
  func.func @transform_2(%arg0: i32, %arg1: i32) -> (i32, i32, i32) {
    %c0_i32 = arith.constant 0 : i32
    %c0_i32_0 = arith.constant 0 : i32
    return %arg0, %c0_i32, %arg1 : i32, i32, i32
  }
}

</mosaic_0001>

<llo_original>
// kernel: tpu_custom_call.1
$region0: #{tpu_custom_call.1}
  #allocation0 [shape = 'u32[]', space=smem, size = 0x4, offset = 0x4, fixed_abs, tag = 'smem constant byte address 0x4 - core index']
  #allocation1 [shape = 'u32[144,128]{1,0:T(1,128)}', space=vmem, size = 0x12000, scoped, tag = 'internal scratch']
  %s0 = inlined_call_operand.vmem [shape: f32[8,3,256], index: 0, kind: input, shape index: {}]
  %s1 = inlined_call_operand.vmem [shape: f32[3,32,1], index: 1, kind: input, shape index: {}]
  %s2 = inlined_call_operand.hbm [shape: f32[8,32,256], index: 2, kind: output, shape index: {}]
  %s3 = sld [smem:[#allocation0]]
  $region41: #{tpu_custom_call.1} parent=0
    _
  %s5 = ssub.s32 1, %s3
  %s6 = scalar_select 0, %s5, %s3
  $region1: #{tpu_custom_call.1} parent=0
    #allocation2 [shape = 'u8[65536]{0}', space=vmem, size = 0x10000, scoped, tag = 'output window, operand 0']
    #allocation3 [shape = 's32[2]{0}', space=sflag, size = 0x8, scoped, tag = 'scoped memory for tpu_custom_call.1']
    %7 = vsyncpa [#allocation3], 0
    %s8 = scalar_lea.sflag [#allocation3], 1
    %9 = vsyncpa %s8, 0
    loop: start=0, step=1, limit=10
    $region2: #{tpu_custom_call.1} parent=1 // loop_pre_header
      _
    $region3: #{tpu_custom_call.1} parent=1 // loop_header
      %s11 = sphi 0, %s15
      %p12 = scmp.ge.s32.totalorder %s11, 10
      %s18 = sphi 0, %s30
      %s19 = sphi 0, %s26
      %s20 = sphi 0, %s18
      %s21 = sphi 0, %s19
      %s22 = sphi 0, %s20
      %s23 = sphi 0, %s21
      %s35 = sphi 0, %s37
      %s38 = sphi 0, %s35
      %s39 = sphi 0, %s38
      %s55 = sphi 0, %s39
      %s59 = sphi 0, %s59
      %s61 = sphi 0, %s59
      %s62 = sphi 0, %s61
      %s76 = sphi 0, %s62
      %s84 = sphi 0, %s86
      %s87 = sphi 0, %s84
      %s88 = sphi 0, %s87
      %s104 = sphi 0, %s88
    $region4: #{tpu_custom_call.1} parent=1 // loop_header_branch
      %14 = sbr.rel (%p12) target = $region8
    $region5: #{tpu_custom_call.1} parent=1 // loop_body
      %s16 = ssub.s32 %s11, 1
      %s17 = ssub.s32 %s11, 2
      %s24 = sadd.s32 1, %s19
      %p25 = scmp.ge.s32.totalorder %s24, 1
      %s26 = scalar_select %p25, 0, %s24
      %s27 = sadd.s32 1, %s18
      %s28 = scalar_select %p25, %s27, %s18
      %p29 = scmp.ge.s32.totalorder %s28, 8
      %s30 = scalar_select %p29, 0, %s28
      %s31 = ssub.s32 %s18, %s30
      %s32 = ssub.s32 %s19, %s26
      %s33 = sor.u32 %s31, %s32
      %p34 = scmp.eq.s32.totalorder %s33, 0
      %s36 = sadd.s32 %s35, 1
      %s37 = scalar_select %p34, %s35, %s36
      %p40 = pneg %p34
      %p41 = scmp.eq.s32.totalorder %s11, 7
      %p42 = por %p40, %p41
      %p43 = scmp.ne.s32.totalorder %s35, %s38
      %p44 = scmp.eq.s32.totalorder %s11, 0
      %p45 = por %p43, %p44
      %p46 = scmp.ne.s32.totalorder %s35, %s38
      %p47 = scmp.eq.s32.totalorder %s16, 7
      %p48 = por %p46, %p47
      %p49 = scmp.ne.s32.totalorder %s38, %s39
      %p50 = scmp.eq.s32.totalorder %s16, 0
      %p51 = por %p49, %p50
      %p52 = scmp.ne.s32.totalorder %s38, %s39
      %p53 = scmp.eq.s32.totalorder %s17, 7
      %p54 = por %p52, %p53
      %p56 = scmp.ne.s32.totalorder %s39, %s55
      %p57 = scmp.eq.s32.totalorder %s17, 0
      %p58 = por %p56, %p57
      %s60 = sadd.s32 %s59, 1
      %p63 = scmp.eq.s32.totalorder %s11, 7
      %p64 = scmp.ne.s32.totalorder %s59, %s61
      %p65 = scmp.eq.s32.totalorder %s11, 0
      %p66 = por %p64, %p65
      %p67 = scmp.ne.s32.totalorder %s59, %s61
      %p68 = scmp.eq.s32.totalorder %s16, 7
      %p69 = por %p67, %p68
      %p70 = scmp.ne.s32.totalorder %s61, %s62
      %p71 = scmp.eq.s32.totalorder %s16, 0
      %p72 = por %p70, %p71
      %p73 = scmp.ne.s32.totalorder %s61, %s62
      %p74 = scmp.eq.s32.totalorder %s17, 7
      %p75 = por %p73, %p74
      %p77 = scmp.ne.s32.totalorder %s62, %s76
      %p78 = scmp.eq.s32.totalorder %s17, 0
      %p79 = por %p77, %p78
      %s80 = ssub.s32 %s18, %s30
      %s81 = ssub.s32 %s19, %s26
      %s82 = sor.u32 %s80, %s81
      %p83 = scmp.eq.s32.totalorder %s82, 0
      %s85 = sadd.s32 %s84, 1
      %s86 = scalar_select %p83, %s84, %s85
      %p89 = pneg %p83
      %p90 = scmp.eq.s32.totalorder %s11, 7
      %p91 = por %p89, %p90
      %p92 = scmp.ne.s32.totalorder %s84, %s87
      %p93 = scmp.eq.s32.totalorder %s11, 0
      %p94 = por %p92, %p93
      %p95 = scmp.ne.s32.totalorder %s84, %s87
      %p96 = scmp.eq.s32.totalorder %s16, 7
      %p97 = por %p95, %p96
      %p98 = scmp.ne.s32.totalorder %s87, %s88
      %p99 = scmp.eq.s32.totalorder %s16, 0
      %p100 = por %p98, %p99
      %p101 = scmp.ne.s32.totalorder %s87, %s88
      %p102 = scmp.eq.s32.totalorder %s17, 7
      %p103 = por %p101, %p102
      %p105 = scmp.ne.s32.totalorder %s88, %s104
      %p106 = scmp.eq.s32.totalorder %s17, 0
      %p107 = por %p105, %p106
      %p108 = scmp.le.s32.totalorder 1, %s11
      %p109 = scmp.lt.s32.totalorder %s11, 9
      %p110 = pnand %p108, %p109
      %p111 = pneg %p110
      // Predicated region
      $region9: #{tpu_custom_call.1} parent=5 // pred_check
        _
      $region10: #{tpu_custom_call.1} parent=5 // pred_check_branch
        %113 = sbr.rel (%p110) target = $region12
      $region11: #{tpu_custom_call.1} parent=5 // pred_region
        %s114 = ssub.s32 %s11, 1
        // Predicated region
        $region13: #{tpu_custom_call.1} parent=11 // pred_check
          %p115 = pneg %p72
        $region14: #{tpu_custom_call.1} parent=11 // pred_check_branch
          %117 = sbr.rel (%p115) target = $region16
        $region15: #{tpu_custom_call.1} parent=11 // pred_region
          _
        $region16: #{tpu_custom_call.1} parent=11 // pred_fallthru
          _
      $region12: #{tpu_custom_call.1} parent=5 // pred_fallthru
        _
      %p118 = scmp.lt.s32.totalorder %s11, 8
      // Predicated region
      $region17: #{tpu_custom_call.1} parent=5 // pred_check
        %p119 = pneg %p118
      $region18: #{tpu_custom_call.1} parent=5 // pred_check_branch
        %121 = sbr.rel (%p119) target = $region20
      $region19: #{tpu_custom_call.1} parent=5 // pred_region
        // Predicated region
        $region21: #{tpu_custom_call.1} parent=19 // pred_check
          %p122 = pneg %p45
        $region22: #{tpu_custom_call.1} parent=19 // pred_check_branch
          %124 = sbr.rel (%p122) target = $region24
        $region23: #{tpu_custom_call.1} parent=19 // pred_region
          %s125 = smul.u32 2, %s19
          %p126 = scmp.lt.s32.totalorder %s18, 7
          %s127 = scalar_select %p126, %s18, 7
          %p128 = scmp.lt.s32.totalorder %s125, 1
          %s129 = scalar_select %p128, %s125, 1
          %s130 = smul.addr %s127, 2
          %s131 = sadd.s32 %s129, %s130
          %s132 = smul.addr %s131, 4
          %s133 = scalar_lea.vmem %s0, %s132
          %s134 = smul.u32 2, %s19
        $region24: #{tpu_custom_call.1} parent=19 // pred_fallthru
          _
      $region20: #{tpu_custom_call.1} parent=5 // pred_fallthru
        _
      %p135 = scmp.le.s32.totalorder 1, %s11
      %p136 = scmp.lt.s32.totalorder %s11, 9
      %p137 = pnand %p135, %p136
      %p138 = pneg %p137
      // Predicated region
      $region25: #{tpu_custom_call.1} parent=5 // pred_check
        _
      $region26: #{tpu_custom_call.1} parent=5 // pred_check_branch
        %140 = sbr.rel (%p137) target = $region28
      $region27: #{tpu_custom_call.1} parent=5 // pred_region
        %s141 = ssub.s32 %s11, 1
        %s142 = smul.u32 2, %s21
        %p143 = scmp.lt.s32.totalorder %s20, 7
        %s144 = scalar_select %p143, %s20, 7
        %p145 = scmp.lt.s32.totalorder %s142, 1
        %s146 = scalar_select %p145, %s142, 1
        %s147 = smul.addr %s144, 2
        %s148 = sadd.s32 %s146, %s147
        %s149 = smul.addr %s148, 4
        %s150 = scalar_lea.vmem %s0, %s149
        %p151 = pneg %p51
        %p152 = pneg %p48
        %p153 = pneg %p72
        %p154 = pneg %p69
        %p155 = pneg %p100
        %p156 = pneg %p97
        %s157 = sand.u32 %s87, 1
        %s158 = scalar_lea.sflag [#allocation3], %s157
        %s159 = sand.u32 %s87, 1
        %s160 = smul.addr %s159, 64
        %s161 = scalar_lea.vmem [#allocation2], %s160
        %s162 = smul.u32 2, %s21
        %p163 = scmp.lt.s32.totalorder %s20, 7
        %s164 = scalar_select %p163, %s20, 7
        %p165 = scmp.lt.s32.totalorder %s162, 1
        %s166 = scalar_select %p165, %s162, 1
        %s167 = smul.addr %s164, 2
        %s168 = sadd.s32 %s166, %s167
        %s169 = smul.addr %s168, 4
        %s170 = scalar_lea.vmem %s0, %s169
        %s171 = smul.u32 2, %s21
        %s172 = smul.u32 2, %s21
        %v173 = vld [vmem:[%s170] ss:$4 sm:$0x3]
        %s174 = scalar_lea.vmem %s170, 1
        %v175 = vld [vmem:[%s174] ss:$4 sm:$0x3]
        %s176 = scalar_lea.vmem %s170, 2
        %v177 = vld [vmem:[%s176] ss:$4 sm:$0x3]
        %v178 = vld [vmem:[%s1] sm:$0xff]
        %v179 = vld [vmem:[%s1 + $0x8] sm:$0xff]
        %v180 = vld [vmem:[%s1 + $0x10] sm:$0xff]
        %v181 = vld [vmem:[%s1 + $0x18] sm:$0xff]
        %s182 = scalar_lea.vmem %s1, 32
        %v183 = vld [vmem:[%s182] sm:$0xff]
        %v184 = vld [vmem:[%s182 + $0x8] sm:$0xff]
        %v185 = vld [vmem:[%s182 + $0x10] sm:$0xff]
        %v186 = vld [vmem:[%s182 + $0x18] sm:$0xff]
        %s187 = scalar_lea.vmem %s1, 64
        %v188 = vld [vmem:[%s187] sm:$0xff]
        %v189 = vld [vmem:[%s187 + $0x8] sm:$0xff]
        %v190 = vld [vmem:[%s187 + $0x10] sm:$0xff]
        %v191 = vld [vmem:[%s187 + $0x18] sm:$0xff]
        %193 = vset.pattern.permute.xlu0 0
        %194 = vperm.xlu0 %193, %v178
        %v195 = vpop.permute.xlu0 %194
        %198 = vset.pattern.permute.xlu0 0
        %199 = vperm.xlu0 %198, %v179
        %v200 = vpop.permute.xlu0 %199
        %203 = vset.pattern.permute.xlu0 0
        %204 = vperm.xlu0 %203, %v180
        %v205 = vpop.permute.xlu0 %204
        %208 = vset.pattern.permute.xlu0 0
        %209 = vperm.xlu0 %208, %v181
        %v210 = vpop.permute.xlu0 %209
        %v213 = vlaneseq
        %v214 = vshrl.u32 %v213, 7
        %v215 = vsub.s32 0, %v214
        %v216 = vrot.slane %v173, %v215
        %v217 = vlaneseq
        %v218 = vshrl.u32 %v217, 7
        %v219 = vsub.s32 1, %v218
        %v220 = vrot.slane %v173, %v219
        %v223 = vmul.f32 %v195, %v216
        %v224 = vmul.f32 %v195, %v220
        %v225 = vmul.f32 %v200, %v216
        %v226 = vmul.f32 %v200, %v220
        %v227 = vmul.f32 %v205, %v216
        %v228 = vmul.f32 %v205, %v220
        %v229 = vmul.f32 %v210, %v216
        %v230 = vmul.f32 %v210, %v220
        %232 = vset.pattern.permute.xlu0 0
        %233 = vperm.xlu0 %232, %v183
        %v234 = vpop.permute.xlu0 %233
        %237 = vset.pattern.permute.xlu0 0
        %238 = vperm.xlu0 %237, %v184
        %v239 = vpop.permute.xlu0 %238
        %242 = vset.pattern.permute.xlu0 0
        %243 = vperm.xlu0 %242, %v185
        %v244 = vpop.permute.xlu0 %243
        %247 = vset.pattern.permute.xlu0 0
        %248 = vperm.xlu0 %247, %v186
        %v249 = vpop.permute.xlu0 %248
        %v252 = vlaneseq
        %v253 = vshrl.u32 %v252, 7
        %v254 = vsub.s32 0, %v253
        %v255 = vrot.slane %v175, %v254
        %v256 = vlaneseq
        %v257 = vshrl.u32 %v256, 7
        %v258 = vsub.s32 1, %v257
        %v259 = vrot.slane %v175, %v258
        %v262 = vmul.f32 %v234, %v255
        %v263 = vmul.f32 %v234, %v259
        %v264 = vmul.f32 %v239, %v255
        %v265 = vmul.f32 %v239, %v259
        %v266 = vmul.f32 %v244, %v255
        %v267 = vmul.f32 %v244, %v259
        %v268 = vmul.f32 %v249, %v255
        %v269 = vmul.f32 %v249, %v259
        %v270 = vadd.f32 %v223, %v262
        %v271 = vadd.f32 %v224, %v263
        %v272 = vadd.f32 %v225, %v264
        %v273 = vadd.f32 %v226, %v265
        %v274 = vadd.f32 %v227, %v266
        %v275 = vadd.f32 %v228, %v267
        %v276 = vadd.f32 %v229, %v268
        %v277 = vadd.f32 %v230, %v269
        %279 = vset.pattern.permute.xlu0 0
        %280 = vperm.xlu0 %279, %v188
        %v281 = vpop.permute.xlu0 %280
        %284 = vset.pattern.permute.xlu0 0
        %285 = vperm.xlu0 %284, %v189
        %v286 = vpop.permute.xlu0 %285
        %289 = vset.pattern.permute.xlu0 0
        %290 = vperm.xlu0 %289, %v190
        %v291 = vpop.permute.xlu0 %290
        %294 = vset.pattern.permute.xlu0 0
        %295 = vperm.xlu0 %294, %v191
        %v296 = vpop.permute.xlu0 %295
        %v299 = vlaneseq
        %v300 = vshrl.u32 %v299, 7
        %v301 = vsub.s32 0, %v300
        %v302 = vrot.slane %v177, %v301
        %v303 = vlaneseq
        %v304 = vshrl.u32 %v303, 7
        %v305 = vsub.s32 1, %v304
        %v306 = vrot.slane %v177, %v305
        %v309 = vmul.f32 %v281, %v302
        %v310 = vmul.f32 %v281, %v306
        %v311 = vmul.f32 %v286, %v302
        %v312 = vmul.f32 %v286, %v306
        %v313 = vmul.f32 %v291, %v302
        %v314 = vmul.f32 %v291, %v306
        %v315 = vmul.f32 %v296, %v302
        %v316 = vmul.f32 %v296, %v306
        %v317 = vadd.f32 %v270, %v309
        %v318 = vadd.f32 %v271, %v310
        %v319 = vadd.f32 %v272, %v311
        %v320 = vadd.f32 %v273, %v312
        %v321 = vadd.f32 %v274, %v313
        %v322 = vadd.f32 %v275, %v314
        %v323 = vadd.f32 %v276, %v315
        %v324 = vadd.f32 %v277, %v316
        %v325 = vmul.f32 %v317, 0.1
        %v326 = vmul.f32 %v318, 0.1
        %v327 = vmul.f32 %v319, 0.1
        %v328 = vmul.f32 %v320, 0.1
        %v329 = vmul.f32 %v321, 0.1
        %v330 = vmul.f32 %v322, 0.1
        %v331 = vmul.f32 %v323, 0.1
        %v332 = vmul.f32 %v324, 0.1
        %v333 = vmax.f32 %v317, %v325
        %v334 = vmax.f32 %v318, %v326
        %v335 = vmax.f32 %v319, %v327
        %v336 = vmax.f32 %v320, %v328
        %v337 = vmax.f32 %v321, %v329
        %v338 = vmax.f32 %v322, %v330
        %v339 = vmax.f32 %v323, %v331
        %v340 = vmax.f32 %v324, %v332
        %341 = vst [vmem:[%s161] sm:$0xff] %v333
        %342 = vst [vmem:[%s161 + $0x8] sm:$0xff] %v334
        %343 = vst [vmem:[%s161 + $0x10] sm:$0xff] %v335
        %344 = vst [vmem:[%s161 + $0x18] sm:$0xff] %v336
        %345 = vst [vmem:[%s161 + $0x20] sm:$0xff] %v337
        %346 = vst [vmem:[%s161 + $0x28] sm:$0xff] %v338
        %347 = vst [vmem:[%s161 + $0x30] sm:$0xff] %v339
        %348 = vst [vmem:[%s161 + $0x38] sm:$0xff] %v340
        %s349 = sand.u32 %s87, 1
        %s350 = scalar_lea.sflag [#allocation3], %s349
        %s351 = sand.u32 %s87, 1
        %s352 = smul.addr %s351, 64
        %s353 = scalar_lea.vmem [#allocation2], %s352
        // Predicated region
        $region29: #{tpu_custom_call.1} parent=27 // pred_check
          %p354 = pneg %p97
        $region30: #{tpu_custom_call.1} parent=27 // pred_check_branch
          %356 = sbr.rel (%p354) target = $region32
        $region31: #{tpu_custom_call.1} parent=27 // pred_region
          %s357 = smul.u32 2, %s21
          %s359 = ssub.s32 1024, 1024
          %360 = vsyncadd %s350, %s359
          %s361 = smul.addr %s20, 8
          %s362 = sadd.s32 %s357, %s361
          %s363 = smul.addr %s362, 128
          %s364 = scalar_lea.hbm %s2, %s363
          %s365 = sshll.u32 %s353, 4
          %s366 = int_to_ptr.vmem [resolvable:$true] %s365
          %371 = dma.vmem_to_hbm [thread:$0]  %s366, 1024, %s364, %s350, 256, 256, 16
        $region32: #{tpu_custom_call.1} parent=27 // pred_fallthru
          _
      $region28: #{tpu_custom_call.1} parent=5 // pred_fallthru
        _
      %p372 = scmp.le.s32.totalorder 2, %s11
      // Predicated region
      $region33: #{tpu_custom_call.1} parent=5 // pred_check
        %p373 = pneg %p372
      $region34: #{tpu_custom_call.1} parent=5 // pred_check_branch
        %375 = sbr.rel (%p373) target = $region36
      $region35: #{tpu_custom_call.1} parent=5 // pred_region
        %s376 = ssub.s32 %s11, 2
        // Predicated region
        $region37: #{tpu_custom_call.1} parent=35 // pred_check
          %p377 = pneg %p103
        $region38: #{tpu_custom_call.1} parent=35 // pred_check_branch
          %379 = sbr.rel (%p377) target = $region40
        $region39: #{tpu_custom_call.1} parent=35 // pred_region
          %s380 = sand.u32 %s88, 1
          %s381 = scalar_lea.sflag [#allocation3], %s380
          %s382 = sand.u32 %s88, 1
          %s383 = smul.addr %s382, 64
          %s384 = scalar_lea.vmem [#allocation2], %s383
          %385 = dma.done %s381, 1024
        $region40: #{tpu_custom_call.1} parent=35 // pred_fallthru
          _
      $region36: #{tpu_custom_call.1} parent=5 // pred_fallthru
        _
    $region6: #{tpu_custom_call.1} parent=1 // loop_footer
      %s15 = sadd.s32 1, %s11
    $region7: #{tpu_custom_call.1} parent=1 // loop_footer_branch
      %10 = sbr.rel target = $region3
    $region8: #{tpu_custom_call.1} parent=1 // loop_exit
      _
    %386 = vsyncpa [#allocation3], 1
    %s387 = scalar_lea.sflag [#allocation3], 1
    %388 = vsyncpa %s387, 1

</llo_original>
